<compile_context>
chip_gen: v7x
topology: tpu7x:2x2x1
jax: 0.10.0
libtpu: 0.0.40
codegen_flags: <defaults>
</compile_context>

<pallas_src>
import functools

import jax
import jax.numpy as jnp
from jax.experimental import pallas as pl
from jax.experimental.pallas import tpu as pltpu

_SUBLANE = 8  # f32 sublane width (second-to-last dim granularity)


def _round_up(v, m):
    return (v + m - 1) // m * m


def _choose_batch_tile(batch):
    """Adaptive batch tile TB.

    - batch <= 64   : single block covering the sublane-rounded batch.
    - batch <= 512  : two blocks (keeps padding waste < 16 rows and gives v7x
                      megacore 2 grid steps to shard across TensorCores).
    - larger batches: biggest tile in {1024, 512, 256, 128} that keeps >= 2
                      grid steps and <= 12.5% batch-padding overshoot.
    """
    if batch <= 64:
        return _round_up(batch, _SUBLANE)
    if batch <= 512:
        return _round_up(batch, 2 * _SUBLANE) // 2
    for cand in (1024, 512, 256, 128):
        padded = _round_up(batch, cand)
        if padded // cand >= 2 and padded - batch <= batch // 8:
            return cand
    return 128


def _dnn_kernel(n_layers, *refs):
    """Fused MLP: (Linear + Sigmoid) x (n_layers-1), then Linear + Softmax.

    refs = (x_ref, w0_ref, b0_ref, ..., w_{L-1}_ref, b_{L-1}_ref, o_ref)
      x_ref : (TB, d0)        f32
      w_i   : (d_i, d_{i+1})  bf16  (VMEM-resident: constant index_map)
      b_i   : (1, d_{i+1})    f32
      o_ref : (TB, d_L)       f32
    """
    x_ref = refs[0]
    o_ref = refs[-1]
    params = refs[1:-1]

    h = x_ref[...]  # f32 activations
    for i in range(n_layers):
        w = params[2 * i][...]        # bf16
        b = params[2 * i + 1][...]    # f32
        # bf16 MXU operands, f32 accumulation; elementwise math stays f32
        # (v5e has no bf16 VPU/EUP).
        y = jnp.dot(h.astype(jnp.bfloat16), w,
                    preferred_element_type=jnp.float32) + b
        if i < n_layers - 1:
            h = jax.nn.sigmoid(y)                       # nn.Sigmoid()
        else:
            # nn.Softmax(dim=-1). Last dim is unpadded, so no lane masking.
            # Exact divide keeps row sums == 1 to f32 precision (the approx
            # reciprocal was the source of the previous assertion failure).
            m = jnp.max(y, axis=-1, keepdims=True)
            e = jnp.exp(y - m)
            h = e / jnp.sum(e, axis=-1, keepdims=True)
    o_ref[...] = h.astype(o_ref.dtype)


def init_dnn_params(key, seq_sizes_dot):
    """Deterministic init mirroring torch.nn.Linear default (U(-1/sqrt(fan_in), +))."""
    params = []
    for fan_in, fan_out in zip(seq_sizes_dot[:-1], seq_sizes_dot[1:]):
        key, kw, kb = jax.random.split(key, 3)
        bound = 1.0 / jnp.sqrt(jnp.float32(fan_in))
        # stored as [in, out] (transpose of torch's [out, in]); math identical.
        w = jax.random.uniform(kw, (fan_in, fan_out), jnp.float32, -bound, bound)
        b = jax.random.uniform(kb, (1, fan_out), jnp.float32, -bound, bound)
        params.append((w, b))
    return params


@jax.jit
def dnn_forward(x, flat_params):
    n_layers = len(flat_params) // 2
    batch, in_dim = x.shape
    out_dim = flat_params[-2].shape[1]

    # Real (unpadded) feature dims: d0 -> d1 -> ... -> dL.
    dims = [in_dim] + [flat_params[2 * i].shape[1] for i in range(n_layers)]

    # Weights -> bf16 once (tiny, VMEM-resident). Biases stay f32.
    cast_params = []
    for i in range(n_layers):
        cast_params.append(flat_params[2 * i].astype(jnp.bfloat16))
        cast_params.append(flat_params[2 * i + 1].astype(jnp.float32))

    # Only the batch dim is ever padded (identity when batch % TB == 0).
    tb = _choose_batch_tile(batch)
    padded_batch = _round_up(batch, tb)
    x_p = jnp.pad(x, ((0, padded_batch - batch), (0, 0)))

    grid = (padded_batch // tb,)

    in_specs = [pl.BlockSpec((tb, dims[0]), lambda g: (g, 0))]
    for i in range(n_layers):
        # Constant index_map -> weights/biases stay VMEM-resident across the
        # batch grid. (Total ~11 KiB bf16 here, so default double-buffering is
        # harmless; pl.Buffered(1) only becomes relevant for much larger layers.)
        in_specs.append(pl.BlockSpec((dims[i], dims[i + 1]), lambda g: (0, 0)))
        in_specs.append(pl.BlockSpec((1, dims[i + 1]), lambda g: (0, 0)))
    out_spec = pl.BlockSpec((tb, out_dim), lambda g: (g, 0))

    kernel = functools.partial(_dnn_kernel, n_layers)
    out_p = pl.pallas_call(
        kernel,
        grid=grid,
        in_specs=in_specs,
        out_specs=out_spec,
        out_shape=jax.ShapeDtypeStruct((padded_batch, out_dim), jnp.float32),
        compiler_params=pltpu.CompilerParams(
            # Shards the batch grid across v7x's 2 TensorCores when grid >= 2;
            # no-op on v5e/v6e.
            dimension_semantics=("parallel",),
        ),
    )(x_p, *cast_params)

    return out_p[:batch]


def dnn_reference(x, flat_params):
    """Pure-JAX f32 reference for correctness check."""
    n_layers = len(flat_params) // 2
    h = x.astype(jnp.float32)
    for i in range(n_layers):
        w = flat_params[2 * i]
        b = flat_params[2 * i + 1]
        h = h @ w + b
        if i < n_layers - 1:
            h = jax.nn.sigmoid(h)
        else:
            h = jax.nn.softmax(h, axis=-1)
    return h


def _check(batch, seq_sizes_dot, key):
    key, kx = jax.random.split(key)
    x = jax.random.normal(kx, (batch, seq_sizes_dot[0]), jnp.float32)
    params = init_dnn_params(key, seq_sizes_dot)
    flat_params = tuple(p for wb in params for p in wb)

    out = jax.block_until_ready(dnn_forward(x, flat_params))
    ref = dnn_reference(x, flat_params)

    assert out.shape == (batch, seq_sizes_dot[-1])
    # bf16 matmul operands => relaxed tolerance vs f32 reference.
    assert jnp.allclose(out, ref, atol=2e-2, rtol=2e-2), "mismatch vs reference"
    # Exact-divide softmax: rows sum to 1 to f32 precision.
    assert jnp.allclose(jnp.sum(out, axis=-1), 1.0, atol=1e-4)


if __name__ == "__main__":
    # Small shapes consistent with the module's forward (2D [batch, features] input).
    seq_sizes_dot = (32, 64, 32, 16)  # 2x (Linear + Sigmoid) + Linear + Softmax
    key = jax.random.PRNGKey(0)

    # Single-block small batch.
    _check(batch=8, seq_sizes_dot=seq_sizes_dot, key=key)
    # Multi-step grid (exercises batch tiling / padding path: TB=152, 2 steps).
    _check(batch=300, seq_sizes_dot=seq_sizes_dot, key=key)

    print("KERNEL_OK")
</pallas_src>

<mosaic_0001>
module attributes {stable_mosaic.version = 11 : i64} {
  func.func @_dnn_kernel(%arg0: i32, %arg1: memref<8x32xf32, #tpu.memory_space<vmem>>, %arg2: memref<32x64xbf16, #tpu.memory_space<vmem>>, %arg3: memref<1x64xf32, #tpu.memory_space<vmem>>, %arg4: memref<64x32xbf16, #tpu.memory_space<vmem>>, %arg5: memref<1x32xf32, #tpu.memory_space<vmem>>, %arg6: memref<32x16xbf16, #tpu.memory_space<vmem>>, %arg7: memref<1x16xf32, #tpu.memory_space<vmem>>, %arg8: memref<8x16xf32, #tpu.memory_space<vmem>>) attributes {dimension_semantics = [#tpu.dimension_semantics<parallel>], iteration_bounds = array<i64: 1>, scalar_prefetch = 0 : i64, scratch_operands = 0 : i64, tpu.core_type = #tpu.core_type<tc>, window_params = [{transform_indices = @transform_0, window_bounds = array<i64: 8, 32>}, {pipeline_mode = #tpu.pipeline_mode<synchronous>, transform_indices = @transform_1, window_bounds = array<i64: 32, 64>}, {pipeline_mode = #tpu.pipeline_mode<synchronous>, transform_indices = @transform_2, window_bounds = array<i64: 1, 64>}, {pipeline_mode = #tpu.pipeline_mode<synchronous>, transform_indices = @transform_3, window_bounds = array<i64: 64, 32>}, {pipeline_mode = #tpu.pipeline_mode<synchronous>, transform_indices = @transform_4, window_bounds = array<i64: 1, 32>}, {pipeline_mode = #tpu.pipeline_mode<synchronous>, transform_indices = @transform_5, window_bounds = array<i64: 32, 16>}, {pipeline_mode = #tpu.pipeline_mode<synchronous>, transform_indices = @transform_6, window_bounds = array<i64: 1, 16>}, {transform_indices = @transform_7, window_bounds = array<i64: 8, 16>}]} {
    %c0 = arith.constant 0 : index
    %c0_0 = arith.constant 0 : index
    %0 = vector.load %arg1[%c0, %c0_0] : memref<8x32xf32, #tpu.memory_space<vmem>>, vector<8x32xf32>
    %c0_1 = arith.constant 0 : index
    %c0_2 = arith.constant 0 : index
    %1 = vector.load %arg2[%c0_1, %c0_2] : memref<32x64xbf16, #tpu.memory_space<vmem>>, vector<32x64xbf16>
    %c0_3 = arith.constant 0 : index
    %c0_4 = arith.constant 0 : index
    %2 = vector.load %arg3[%c0_3, %c0_4] : memref<1x64xf32, #tpu.memory_space<vmem>>, vector<1x64xf32>
    %3 = arith.truncf %0 : vector<8x32xf32> to vector<8x32xbf16>
    %cst = arith.constant dense<0.000000e+00> : vector<8x64xf32>
    %4 = tpu.matmul %3, %1, %cst {dimension_numbers = #tpu.dot_dimension_numbers<[1], [0], [0], [1], [0, 0, 1, 1], [], []>} : vector<8x32xbf16>, vector<32x64xbf16>, vector<8x64xf32> -> vector<8x64xf32>
    %5 = vector.broadcast %2 : vector<1x64xf32> to vector<8x64xf32>
    %6 = arith.addf %4, %5 : vector<8x64xf32>
    %7 = arith.negf %6 : vector<8x64xf32>
    %8 = math.exp %7 : vector<8x64xf32>
    %cst_5 = arith.constant 1.000000e+00 : f32
    %9 = vector.broadcast %cst_5 : f32 to vector<8x64xf32>
    %10 = arith.addf %9, %8 : vector<8x64xf32>
    %11 = arith.divf %9, %10 : vector<8x64xf32>
    %c0_6 = arith.constant 0 : index
    %c0_7 = arith.constant 0 : index
    %12 = vector.load %arg4[%c0_6, %c0_7] : memref<64x32xbf16, #tpu.memory_space<vmem>>, vector<64x32xbf16>
    %c0_8 = arith.constant 0 : index
    %c0_9 = arith.constant 0 : index
    %13 = vector.load %arg5[%c0_8, %c0_9] : memref<1x32xf32, #tpu.memory_space<vmem>>, vector<1x32xf32>
    %14 = arith.truncf %11 : vector<8x64xf32> to vector<8x64xbf16>
    %cst_10 = arith.constant dense<0.000000e+00> : vector<8x32xf32>
    %15 = tpu.matmul %14, %12, %cst_10 {dimension_numbers = #tpu.dot_dimension_numbers<[1], [0], [0], [1], [0, 0, 1, 1], [], []>} : vector<8x64xbf16>, vector<64x32xbf16>, vector<8x32xf32> -> vector<8x32xf32>
    %16 = vector.broadcast %13 : vector<1x32xf32> to vector<8x32xf32>
    %17 = arith.addf %15, %16 : vector<8x32xf32>
    %18 = arith.negf %17 : vector<8x32xf32>
    %19 = math.exp %18 : vector<8x32xf32>
    %cst_11 = arith.constant 1.000000e+00 : f32
    %20 = vector.broadcast %cst_11 : f32 to vector<8x32xf32>
    %21 = arith.addf %20, %19 : vector<8x32xf32>
    %22 = arith.divf %20, %21 : vector<8x32xf32>
    %c0_12 = arith.constant 0 : index
    %c0_13 = arith.constant 0 : index
    %23 = vector.load %arg6[%c0_12, %c0_13] : memref<32x16xbf16, #tpu.memory_space<vmem>>, vector<32x16xbf16>
    %c0_14 = arith.constant 0 : index
    %c0_15 = arith.constant 0 : index
    %24 = vector.load %arg7[%c0_14, %c0_15] : memref<1x16xf32, #tpu.memory_space<vmem>>, vector<1x16xf32>
    %25 = arith.truncf %22 : vector<8x32xf32> to vector<8x32xbf16>
    %cst_16 = arith.constant dense<0.000000e+00> : vector<8x16xf32>
    %26 = tpu.matmul %25, %23, %cst_16 {dimension_numbers = #tpu.dot_dimension_numbers<[1], [0], [0], [1], [0, 0, 1, 1], [], []>} : vector<8x32xbf16>, vector<32x16xbf16>, vector<8x16xf32> -> vector<8x16xf32>
    %27 = vector.broadcast %24 : vector<1x16xf32> to vector<8x16xf32>
    %28 = arith.addf %26, %27 : vector<8x16xf32>
    %cst_17 = arith.constant dense<0xFF800000> : vector<8xf32>
    %29 = vector.multi_reduction <maximumf>, %28, %cst_17 [1] : vector<8x16xf32> to vector<8xf32>
    %30 = vector.shape_cast %29 : vector<8xf32> to vector<8x1xf32>
    %31 = vector.broadcast %30 : vector<8x1xf32> to vector<8x16xf32>
    %32 = arith.subf %28, %31 : vector<8x16xf32>
    %33 = math.exp %32 : vector<8x16xf32>
    %cst_18 = arith.constant dense<0.000000e+00> : vector<8xf32>
    %34 = vector.multi_reduction <add>, %33, %cst_18 [1] : vector<8x16xf32> to vector<8xf32>
    %35 = vector.shape_cast %34 : vector<8xf32> to vector<8x1xf32>
    %36 = vector.broadcast %35 : vector<8x1xf32> to vector<8x16xf32>
    %37 = arith.divf %33, %36 : vector<8x16xf32>
    %c0_19 = arith.constant 0 : index
    %c0_20 = arith.constant 0 : index
    %38 = vector.load %arg8[%c0_19, %c0_20] : memref<8x16xf32, #tpu.memory_space<vmem>>, vector<8x16xf32>
    tpu.vector_store %arg8[%c0_19, %c0_20], %37 {strides = array<i32>} : memref<8x16xf32, #tpu.memory_space<vmem>>, vector<8x16xf32>,
    return
  }
  func.func @transform_0(%arg0: i32) -> (i32, i32) {
    %c0_i32 = arith.constant 0 : i32
    %c0_i32_0 = arith.constant 0 : i32
    return %arg0, %c0_i32 : i32, i32
  }
  func.func @transform_1(%arg0: i32) -> (i32, i32) {
    %c0_i32 = arith.constant 0 : i32
    %c0_i32_0 = arith.constant 0 : i32
    %c0_i32_1 = arith.constant 0 : i32
    return %c0_i32, %c0_i32_0 : i32, i32
  }
  func.func @transform_2(%arg0: i32) -> (i32, i32) {
    %c0_i32 = arith.constant 0 : i32
    %c0_i32_0 = arith.constant 0 : i32
    %c0_i32_1 = arith.constant 0 : i32
    return %c0_i32, %c0_i32_0 : i32, i32
  }
  func.func @transform_3(%arg0: i32) -> (i32, i32) {
    %c0_i32 = arith.constant 0 : i32
    %c0_i32_0 = arith.constant 0 : i32
    %c0_i32_1 = arith.constant 0 : i32
    return %c0_i32, %c0_i32_0 : i32, i32
  }
  func.func @transform_4(%arg0: i32) -> (i32, i32) {
    %c0_i32 = arith.constant 0 : i32
    %c0_i32_0 = arith.constant 0 : i32
    %c0_i32_1 = arith.constant 0 : i32
    return %c0_i32, %c0_i32_0 : i32, i32
  }
  func.func @transform_5(%arg0: i32) -> (i32, i32) {
    %c0_i32 = arith.constant 0 : i32
    %c0_i32_0 = arith.constant 0 : i32
    %c0_i32_1 = arith.constant 0 : i32
    return %c0_i32, %c0_i32_0 : i32, i32
  }
  func.func @transform_6(%arg0: i32) -> (i32, i32) {
    %c0_i32 = arith.constant 0 : i32
    %c0_i32_0 = arith.constant 0 : i32
    %c0_i32_1 = arith.constant 0 : i32
    return %c0_i32, %c0_i32_0 : i32, i32
  }
  func.func @transform_7(%arg0: i32) -> (i32, i32) {
    %c0_i32 = arith.constant 0 : i32
    %c0_i32_0 = arith.constant 0 : i32
    return %arg0, %c0_i32 : i32, i32
  }
}

</mosaic_0001>

<llo_original>
// kernel: dnn_forward.1
$region0: #{dnn_forward.1}
  #allocation0 [shape = 'u32[]', space=smem, size = 0x4, offset = 0x4, fixed_abs, tag = 'smem constant byte address 0x4 - core index']
  #allocation1 [shape = 'u32[144,128]{1,0:T(1,128)}', space=vmem, size = 0x12000, scoped, tag = 'internal scratch']
  %s0 = inlined_call_operand.vmem [shape: f32[8,32], index: 0, kind: input, shape index: {}]
  %s1 = inlined_call_operand.vmem [shape: bf16[32,64], index: 1, kind: input, shape index: {}]
  %s2 = inlined_call_operand.vmem [shape: f32[1,64], index: 2, kind: input, shape index: {}]
  %s3 = inlined_call_operand.vmem [shape: bf16[64,32], index: 3, kind: input, shape index: {}]
  %s4 = inlined_call_operand.vmem [shape: f32[1,32], index: 4, kind: input, shape index: {}]
  %s5 = inlined_call_operand.vmem [shape: bf16[32,16], index: 5, kind: input, shape index: {}]
  %s6 = inlined_call_operand.vmem [shape: f32[1,16], index: 6, kind: input, shape index: {}]
  %s7 = inlined_call_operand.hbm [shape: f32[8,16], index: 7, kind: output, shape index: {}]
  %s8 = sld [smem:[#allocation0]]
  $region38: #{dnn_forward.1} parent=0
    _
  %s10 = ssub.s32 1, %s8
  %s11 = scalar_select 0, %s10, %s8
  $region1: #{dnn_forward.1} parent=0
    #allocation2 [shape = 'u8[4096]{0}', space=vmem, size = 0x1000, scoped, tag = 'output window, operand 0, single buffered']
    #allocation3 [shape = 's32[1]{0}', space=sflag, size = 0x4, scoped, tag = 'scoped memory for dnn_forward.1']
    %12 = vsyncpa [#allocation3], 0
    // Predicated region
    $region2: #{dnn_forward.1} parent=1 // pred_check
      _
    $region3: #{dnn_forward.1} parent=1 // pred_check_branch
      %14 = sbr.rel (0) target = $region5
    $region4: #{dnn_forward.1} parent=1 // pred_region
      _
    $region5: #{dnn_forward.1} parent=1 // pred_fallthru
      _
    // Predicated region
    $region6: #{dnn_forward.1} parent=1 // pred_check
      _
    $region7: #{dnn_forward.1} parent=1 // pred_check_branch
      %16 = sbr.rel (0) target = $region9
    $region8: #{dnn_forward.1} parent=1 // pred_region
      _
    $region9: #{dnn_forward.1} parent=1 // pred_fallthru
      _
    // Predicated region
    $region10: #{dnn_forward.1} parent=1 // pred_check
      _
    $region11: #{dnn_forward.1} parent=1 // pred_check_branch
      %18 = sbr.rel (0) target = $region13
    $region12: #{dnn_forward.1} parent=1 // pred_region
      _
    $region13: #{dnn_forward.1} parent=1 // pred_fallthru
      _
    // Predicated region
    $region14: #{dnn_forward.1} parent=1 // pred_check
      _
    $region15: #{dnn_forward.1} parent=1 // pred_check_branch
      %20 = sbr.rel (0) target = $region17
    $region16: #{dnn_forward.1} parent=1 // pred_region
      _
    $region17: #{dnn_forward.1} parent=1 // pred_fallthru
      _
    // Predicated region
    $region18: #{dnn_forward.1} parent=1 // pred_check
      _
    $region19: #{dnn_forward.1} parent=1 // pred_check_branch
      %22 = sbr.rel (0) target = $region21
    $region20: #{dnn_forward.1} parent=1 // pred_region
      _
    $region21: #{dnn_forward.1} parent=1 // pred_fallthru
      _
    // Predicated region
    $region22: #{dnn_forward.1} parent=1 // pred_check
      _
    $region23: #{dnn_forward.1} parent=1 // pred_check_branch
      %24 = sbr.rel (0) target = $region25
    $region24: #{dnn_forward.1} parent=1 // pred_region
      _
    $region25: #{dnn_forward.1} parent=1 // pred_fallthru
      _
    // Predicated region
    $region26: #{dnn_forward.1} parent=1 // pred_check
      _
    $region27: #{dnn_forward.1} parent=1 // pred_check_branch
      %26 = sbr.rel (0) target = $region29
    $region28: #{dnn_forward.1} parent=1 // pred_region
      _
    $region29: #{dnn_forward.1} parent=1 // pred_fallthru
      _
    %v28 = vld [vmem:[%s0] sm:$0xff]
    %v29 = vld [vmem:[%s1] sm:$0xf]
    %v30 = vld [vmem:[%s1 + $0x4] sm:$0xf]
    %v31 = vld [vmem:[%s1 + $0x8] sm:$0xf]
    %v32 = vld [vmem:[%s1 + $0xc] sm:$0xf]
    %v33 = vld [vmem:[%s2] sm:$0x1]
    %v34 = vpack.c.bf16 %v28, %v28
    %v36 = vlaneseq
    %v37 = vshrl.u32 %v36, 7
    %v38 = vsub.s32 0, %v37
    %v39 = vrot.slane %v33, %v38
    %v45 = vunpack.c.l.b16 %v29
    %v46 = vunpack.c.l.b16 %v30
    %v47 = vunpack.c.l.b16 %v31
    %v48 = vunpack.c.l.b16 %v32
    %v49 = vpack.c.b16 %v46, %v45
    %v50 = vpack.c.b16 %v48, %v47
    %vm53 = vcmask 261120
    %v55 = vsel %vm53, %v34, 0
    %57 = vmatprep.subr.bf16.mxu0 0
    %58 = vmatpush1.bf16.msra.mxu0 %v49
    %59 = vmatprep.subr.bf16.mxu0 0
    %60 = vmatpush1.bf16.msra.mxu0 %v50
    %61 = vmatprep.subr.bf16.mxu0 0
    %62 = vmatpush1.bf16.msra.mxu0 0
    %63 = vmatprep.subr.bf16.mxu0 0
    %64 = vmatpush1.bf16.msra.mxu0 0
    %65 = vmatprep.subr.bf16.mxu0 0
    %66 = vmatpush1.bf16.msra.mxu0 0
    %67 = vmatprep.subr.bf16.mxu0 0
    %68 = vmatpush1.bf16.msra.mxu0 0
    %69 = vmatprep.subr.bf16.mxu0 0
    %70 = vmatpush1.bf16.msra.mxu0 0
    %71 = vmatprep.subr.bf16.mxu0 0
    %72 = vmatpush1.bf16.msra.mxu0 0
    %73 = vmatprep.subr.bf16.mxu0 0
    %74 = vmatpush1.bf16.msra.mxu0 0
    %75 = vmatprep.subr.bf16.mxu0 0
    %76 = vmatpush1.bf16.msra.mxu0 0
    %77 = vmatprep.subr.bf16.mxu0 0
    %78 = vmatpush1.bf16.msra.mxu0 0
    %79 = vmatprep.subr.bf16.mxu0 0
    %80 = vmatpush1.bf16.msra.mxu0 0
    %81 = vmatprep.subr.bf16.mxu0 0
    %82 = vmatpush1.bf16.msra.mxu0 0
    %83 = vmatprep.subr.bf16.mxu0 0
    %84 = vmatpush1.bf16.msra.mxu0 0
    %85 = vmatprep.subr.bf16.mxu0 0
    %86 = vmatpush1.bf16.msra.mxu0 0
    %87 = vmatprep.subr.bf16.mxu0 0
    %88 = vmatpush1.bf16.msra.mxu0 0
    %89 = vmatprep.mubr.bf16.mxu0 0
    %90 = vmatmul.mubr.bf16.gmra.mrb[0].mxu0 %v55
    %v91 = vpop.f32.mrb[0].mxu0
    %v92 = vadd.f32 %v39, %v91
    %v93 = vpop.f32.mrb[0].mxu0
    %v94 = vpop.f32.mrb[0].mxu0
    %v95 = vpop.f32.mrb[0].mxu0
    %96 = vdwg.mxu0
    %v97 = vxor.u32 %v92, 2147483648
    %v98 = vmul.f32 %v97, 1.442695
    %v99 = vpow.pop %v98
    %v100 = vadd.f32 %v99, 1.0
    %v101 = vrcp.pop %v100
    %v102 = vmul.f32 1.0, %v101
    %v103 = vld [vmem:[%s3] sm:$0xf]
    %v104 = vld [vmem:[%s3 + $0x4] sm:$0xf]
    %v105 = vld [vmem:[%s3 + $0x8] sm:$0xf]
    %v106 = vld [vmem:[%s3 + $0xc] sm:$0xf]
    %v107 = vld [vmem:[%s3 + $0x10] sm:$0xf]
    %v108 = vld [vmem:[%s3 + $0x14] sm:$0xf]
    %v109 = vld [vmem:[%s3 + $0x18] sm:$0xf]
    %v110 = vld [vmem:[%s3 + $0x1c] sm:$0xf]
    %v111 = vld [vmem:[%s4] sm:$0x1]
    %v112 = vpack.c.bf16 %v102, %v102
    %v114 = vlaneseq
    %v115 = vshrl.u32 %v114, 7
    %v116 = vsub.s32 0, %v115
    %v117 = vrot.slane %v111, %v116
    %v127 = vunpack.c.l.b16 %v103
    %v128 = vunpack.c.l.b16 %v104
    %v129 = vunpack.c.l.b16 %v105
    %v130 = vunpack.c.l.b16 %v106
    %v131 = vunpack.c.l.b16 %v107
    %v132 = vunpack.c.l.b16 %v108
    %v133 = vunpack.c.l.b16 %v109
    %v134 = vunpack.c.l.b16 %v110
    %v135 = vpack.c.b16 %v128, %v127
    %v136 = vpack.c.b16 %v130, %v129
    %v137 = vpack.c.b16 %v132, %v131
    %v138 = vpack.c.b16 %v134, %v133
    %vm143 = vcmask 523264
    %v145 = vsel %vm143, %v112, 0
    %147 = vmatprep.subr.bf16.mxu0 0
    %148 = vmatpush1.bf16.msra.mxu0 %v135
    %149 = vmatprep.subr.bf16.mxu0 0
    %150 = vmatpush1.bf16.msra.mxu0 %v136
    %151 = vmatprep.subr.bf16.mxu0 0
    %152 = vmatpush1.bf16.msra.mxu0 %v137
    %153 = vmatprep.subr.bf16.mxu0 0
    %154 = vmatpush1.bf16.msra.mxu0 %v138
    %155 = vmatprep.subr.bf16.mxu0 0
    %156 = vmatpush1.bf16.msra.mxu0 0
    %157 = vmatprep.subr.bf16.mxu0 0
    %158 = vmatpush1.bf16.msra.mxu0 0
    %159 = vmatprep.subr.bf16.mxu0 0
    %160 = vmatpush1.bf16.msra.mxu0 0
    %161 = vmatprep.subr.bf16.mxu0 0
    %162 = vmatpush1.bf16.msra.mxu0 0
    %163 = vmatprep.subr.bf16.mxu0 0
    %164 = vmatpush1.bf16.msra.mxu0 0
    %165 = vmatprep.subr.bf16.mxu0 0
    %166 = vmatpush1.bf16.msra.mxu0 0
    %167 = vmatprep.subr.bf16.mxu0 0
    %168 = vmatpush1.bf16.msra.mxu0 0
    %169 = vmatprep.subr.bf16.mxu0 0
    %170 = vmatpush1.bf16.msra.mxu0 0
    %171 = vmatprep.subr.bf16.mxu0 0
    %172 = vmatpush1.bf16.msra.mxu0 0
    %173 = vmatprep.subr.bf16.mxu0 0
    %174 = vmatpush1.bf16.msra.mxu0 0
    %175 = vmatprep.subr.bf16.mxu0 0
    %176 = vmatpush1.bf16.msra.mxu0 0
    %177 = vmatprep.subr.bf16.mxu0 0
    %178 = vmatpush1.bf16.msra.mxu0 0
    %179 = vmatprep.mubr.bf16.mxu0 0
    %180 = vmatmul.mubr.bf16.gmra.mrb[0].mxu0 %v145
    %v181 = vpop.f32.mrb[0].mxu0
    %v182 = vadd.f32 %v117, %v181
    %v183 = vpop.f32.mrb[0].mxu0
    %v184 = vpop.f32.mrb[0].mxu0
    %v185 = vpop.f32.mrb[0].mxu0
    %186 = vdwg.mxu0
    %v187 = vxor.u32 %v182, 2147483648
    %v188 = vmul.f32 %v187, 1.442695
    %v189 = vpow.pop %v188
    %v190 = vadd.f32 %v189, 1.0
    %v191 = vrcp.pop %v190
    %v192 = vmul.f32 1.0, %v191
    %v193 = vld [vmem:[%s5] sm:$0xf]
    %v194 = vld [vmem:[%s5 + $0x4] sm:$0xf]
    %v195 = vld [vmem:[%s5 + $0x8] sm:$0xf]
    %v196 = vld [vmem:[%s5 + $0xc] sm:$0xf]
    %v197 = vld [vmem:[%s6] sm:$0x1]
    %v198 = vpack.c.bf16 %v192, %v192
    %v200 = vlaneseq
    %v201 = vshrl.u32 %v200, 7
    %v202 = vsub.s32 0, %v201
    %v203 = vrot.slane %v197, %v202
    %v209 = vunpack.c.l.b16 %v193
    %v210 = vunpack.c.l.b16 %v194
    %v211 = vunpack.c.l.b16 %v195
    %v212 = vunpack.c.l.b16 %v196
    %v213 = vpack.c.b16 %v210, %v209
    %v214 = vpack.c.b16 %v212, %v211
    %v218 = vsel %vm53, %v198, 0
    %220 = vmatprep.subr.bf16.mxu0 0
    %221 = vmatpush1.bf16.msra.mxu0 %v213
    %222 = vmatprep.subr.bf16.mxu0 0
    %223 = vmatpush1.bf16.msra.mxu0 %v214
    %224 = vmatprep.subr.bf16.mxu0 0
    %225 = vmatpush1.bf16.msra.mxu0 0
    %226 = vmatprep.subr.bf16.mxu0 0
    %227 = vmatpush1.bf16.msra.mxu0 0
    %228 = vmatprep.subr.bf16.mxu0 0
    %229 = vmatpush1.bf16.msra.mxu0 0
    %230 = vmatprep.subr.bf16.mxu0 0
    %231 = vmatpush1.bf16.msra.mxu0 0
    %232 = vmatprep.subr.bf16.mxu0 0
    %233 = vmatpush1.bf16.msra.mxu0 0
    %234 = vmatprep.subr.bf16.mxu0 0
    %235 = vmatpush1.bf16.msra.mxu0 0
    %236 = vmatprep.subr.bf16.mxu0 0
    %237 = vmatpush1.bf16.msra.mxu0 0
    %238 = vmatprep.subr.bf16.mxu0 0
    %239 = vmatpush1.bf16.msra.mxu0 0
    %240 = vmatprep.subr.bf16.mxu0 0
    %241 = vmatpush1.bf16.msra.mxu0 0
    %242 = vmatprep.subr.bf16.mxu0 0
    %243 = vmatpush1.bf16.msra.mxu0 0
    %244 = vmatprep.subr.bf16.mxu0 0
    %245 = vmatpush1.bf16.msra.mxu0 0
    %246 = vmatprep.subr.bf16.mxu0 0
    %247 = vmatpush1.bf16.msra.mxu0 0
    %248 = vmatprep.subr.bf16.mxu0 0
    %249 = vmatpush1.bf16.msra.mxu0 0
    %250 = vmatprep.subr.bf16.mxu0 0
    %251 = vmatpush1.bf16.msra.mxu0 0
    %252 = vmatprep.mubr.bf16.mxu0 0
    %253 = vmatmul.mubr.bf16.gmra.mrb[0].mxu0 %v218
    %v254 = vpop.f32.mrb[0].mxu0
    %v255 = vadd.f32 %v203, %v254
    %v256 = vpop.f32.mrb[0].mxu0
    %v257 = vpop.f32.mrb[0].mxu0
    %v258 = vpop.f32.mrb[0].mxu0
    %259 = vdwg.mxu0
    %vm260 = vcmask 130048
    %v261 = vsel %vm260, %v255, -inf
    %262 = vmax.xlane.f32.xlu0 %v261
    %v263 = vpop.xlane.xlu0 %262
    %v264 = vsub.f32 %v255, %v263
    %v265 = vmul.f32 %v264, 1.442695
    %v266 = vpow.pop %v265
    %v267 = vsel %vm260, %v266, 0.0
    %268 = vadd.xlane.f32.xlu0 %v267
    %v269 = vpop.xlane.xlu0 %268
    %v270 = vrcp.pop %v269
    %v271 = vmul.f32 %v266, %v270
    %272 = vst.msk [vmem:[#allocation2] sm:$0xff] %vm260, %v271
    // Predicated region
    $region30: #{dnn_forward.1} parent=1 // pred_check
      _
    $region31: #{dnn_forward.1} parent=1 // pred_check_branch
      %274 = sbr.rel (0) target = $region33
    $region32: #{dnn_forward.1} parent=1 // pred_region
      %s276 = ssub.s32 128, 128
      %277 = vsyncadd [#allocation3], %s276
      %s279 = sshll.u32 [#allocation2], 4
      %s280 = int_to_ptr.vmem [resolvable:$true] %s279
      %282 = dma.vmem_to_hbm [thread:$0]  %s280, 128, %s7, [#allocation3]
    $region33: #{dnn_forward.1} parent=1 // pred_fallthru
      _
    // Predicated region
    $region34: #{dnn_forward.1} parent=1 // pred_check
      _
    $region35: #{dnn_forward.1} parent=1 // pred_check_branch
      %284 = sbr.rel (0) target = $region37
    $region36: #{dnn_forward.1} parent=1 // pred_region
      %285 = dma.done [#allocation3], 128
    $region37: #{dnn_forward.1} parent=1 // pred_fallthru
      _
    %286 = vsyncpa [#allocation3], 1

</llo_original>
